<compile_context>
chip_gen: v7x
topology: tpu7x:2x2x1
jax: 0.10.0
libtpu: 0.0.40
codegen_flags: <defaults>
</compile_context>

<pallas_src>
import math

import jax
import jax.numpy as jnp
from jax.experimental import pallas as pl
from jax.experimental.pallas import tpu as pltpu


def _round_up(x, m):
    return (x + m - 1) // m * m


def _make_mlp_kernel(h1, h2, n_out):
    """Build the kernel with static bias-slice offsets baked in."""

    def kernel(xT_ref, w1_ref, w2_ref, w3_ref, b_ref, o_ref):
        xT = xT_ref[...]                                   # (n_in, bt)  f32
        b1 = b_ref[0:h1, :]                                # (h1, 1)
        b2 = b_ref[h1:h1 + h2, :]                          # (h2, 1)
        b3 = b_ref[h1 + h2:h1 + h2 + n_out, :]             # (n_out, 1)

        # Layer 1: (h1, n_in) @ (n_in, bt) -> (h1, bt), ReLU
        a1 = jnp.dot(w1_ref[...], xT, preferred_element_type=jnp.float32) + b1
        a1 = jnp.maximum(a1, 0.0)
        # Layer 2: (h2, h1) @ (h1, bt) -> (h2, bt), ReLU
        a2 = jnp.dot(w2_ref[...], a1, preferred_element_type=jnp.float32) + b2
        a2 = jnp.maximum(a2, 0.0)
        # Output layer: (n_out, h2) @ (h2, bt) -> (n_out, bt)
        y = jnp.dot(w3_ref[...], a2, preferred_element_type=jnp.float32) + b3
        o_ref[...] = y.astype(o_ref.dtype)

    return kernel


def layers_forward(x, params, *, batch_tile=512):
    """Forward pass of `Layers` (ReLU activation) as a single Pallas kernel.

    x: (B, n_input_vars) float32 (PyTorch row-major layout)
    params: dict with PyTorch-layout weights/biases:
        w1 (h1, n_in), b1 (h1, 1), w2 (h2, h1), b2 (h2, 1),
        w3 (n_out, h2), b3 (n_out, 1)
    Returns (B, n_out) float32.
    """
    B, n_in = x.shape
    h1 = params["w1"].shape[0]
    h2 = params["w2"].shape[0]
    n_out = params["w3"].shape[0]
    total_b = h1 + h2 + n_out

    # Batch tiling: tiles are multiples of 128 lanes; ragged batches are padded
    # with zeros and the padded columns are discarded after the kernel.
    assert batch_tile % 128 == 0, "batch_tile must be a multiple of 128 lanes"
    padded_B = _round_up(B, 128)
    bt = min(batch_tile, padded_B)          # small batches -> single invocation
    padded_B = _round_up(padded_B, bt)
    grid = (padded_B // bt,)                # >= 2 tiles shard across v7x's 2 TCs

    # Transpose to batch-on-lanes layout outside the kernel (layout plumbing).
    x_f32 = x.astype(jnp.float32)
    xT = jnp.pad(x_f32, ((0, padded_B - B), (0, 0))).T     # (n_in, padded_B)

    # Pack all biases into one column vector to cut DMA descriptors per step.
    b_packed = jnp.concatenate(
        [params["b1"].astype(jnp.float32),
         params["b2"].astype(jnp.float32),
         params["b3"].astype(jnp.float32)], axis=0)         # (total_b, 1)

    full = lambda shape: pl.BlockSpec(shape, lambda i: (0,) * len(shape))

    flops = 2 * B * (n_in * h1 + h1 * h2 + h2 * n_out)
    bytes_accessed = 4 * (padded_B * (n_in + n_out)
                          + n_in * h1 + h1 * h2 + h2 * n_out + total_b)

    out_t = pl.pallas_call(
        _make_mlp_kernel(h1, h2, n_out),
        out_shape=jax.ShapeDtypeStruct((n_out, padded_B), jnp.float32),
        grid_spec=pltpu.PrefetchScalarGridSpec(
            num_scalar_prefetch=0,
            grid=grid,
            in_specs=[
                pl.BlockSpec((n_in, bt), lambda i: (0, i)),   # xT batch tile
                full((h1, n_in)),                             # w1 (resident)
                full((h2, h1)),                               # w2
                full((n_out, h2)),                            # w3
                full((total_b, 1)),                           # packed biases
            ],
            out_specs=pl.BlockSpec((n_out, bt), lambda i: (0, i)),
        ),
        compiler_params=pltpu.CompilerParams(
            dimension_semantics=("parallel",),
        ),
        cost_estimate=pl.CostEstimate(
            flops=flops, transcendentals=0, bytes_accessed=bytes_accessed),
    )(xT, params["w1"], params["w2"], params["w3"], b_packed)

    # Drop the padded columns and return in the original (B, n_out) layout.
    return out_t[:, :B].T


def init_params(key, n_input_vars, num_of_neurons=(8, 4), n_output_vars=1):
    """Deterministic init mirroring torch.nn.Linear defaults:
    U(-1/sqrt(fan_in), 1/sqrt(fan_in)) for both weight and bias.
    Weights kept in PyTorch (out_features, in_features) layout; biases (out, 1)."""
    dims = [n_input_vars, *num_of_neurons, n_output_vars]
    params = {}
    for idx in range(len(dims) - 1):
        fan_in, fan_out = dims[idx], dims[idx + 1]
        bound = 1.0 / math.sqrt(fan_in)
        key, kw, kb = jax.random.split(key, 3)
        w = jax.random.uniform(kw, (fan_out, fan_in), jnp.float32, -bound, bound)
        b = jax.random.uniform(kb, (fan_out, 1), jnp.float32, -bound, bound)
        params[f"w{idx + 1}"] = w
        params[f"b{idx + 1}"] = b
    return params


if __name__ == "__main__":
    key = jax.random.PRNGKey(0)
    k_param, k_x = jax.random.split(key)

    batch = 16                 # intentionally ragged w.r.t. the 128-lane tile
    n_input_vars = 13          # e.g. housing features after preprocessing

    params = init_params(k_param, n_input_vars, num_of_neurons=(8, 4),
                         n_output_vars=1)
    x = jax.random.normal(k_x, (batch, n_input_vars), jnp.float32)

    out = layers_forward(x, params, batch_tile=512)
    out = jax.block_until_ready(out)

    # Plain-JAX reference (PyTorch semantics: x @ W.T + b).
    ref = x
    ref = jnp.maximum(ref @ params["w1"].T + params["b1"].T, 0.0)
    ref = jnp.maximum(ref @ params["w2"].T + params["b2"].T, 0.0)
    ref = ref @ params["w3"].T + params["b3"].T

    assert out.shape == (batch, 1)
    assert jnp.allclose(out, ref, atol=1e-5, rtol=1e-5)

    print("KERNEL_OK")
</pallas_src>

<mosaic_0001>
module attributes {stable_mosaic.version = 11 : i64} {
  func.func @kernel(%arg0: i32, %arg1: memref<13x128xf32, #tpu.memory_space<vmem>>, %arg2: memref<8x13xf32, #tpu.memory_space<vmem>>, %arg3: memref<4x8xf32, #tpu.memory_space<vmem>>, %arg4: memref<1x4xf32, #tpu.memory_space<vmem>>, %arg5: memref<13x1xf32, #tpu.memory_space<vmem>>, %arg6: memref<1x128xf32, #tpu.memory_space<vmem>>) attributes {dimension_semantics = [#tpu.dimension_semantics<parallel>], iteration_bounds = array<i64: 1>, scalar_prefetch = 0 : i64, scratch_operands = 0 : i64, tpu.core_type = #tpu.core_type<tc>, window_params = [{transform_indices = @transform_0, window_bounds = array<i64: 13, 128>}, {pipeline_mode = #tpu.pipeline_mode<synchronous>, transform_indices = @transform_1, window_bounds = array<i64: 8, 13>}, {pipeline_mode = #tpu.pipeline_mode<synchronous>, transform_indices = @transform_2, window_bounds = array<i64: 4, 8>}, {pipeline_mode = #tpu.pipeline_mode<synchronous>, transform_indices = @transform_3, window_bounds = array<i64: 1, 4>}, {pipeline_mode = #tpu.pipeline_mode<synchronous>, transform_indices = @transform_4, window_bounds = array<i64: 13, 1>}, {transform_indices = @transform_5, window_bounds = array<i64: 1, 128>}]} {
    %c0 = arith.constant 0 : index
    %c0_0 = arith.constant 0 : index
    %0 = vector.load %arg1[%c0, %c0_0] : memref<13x128xf32, #tpu.memory_space<vmem>>, vector<13x128xf32>
    %c0_1 = arith.constant 0 : index
    %c0_2 = arith.constant 0 : index
    %1 = vector.load %arg5[%c0_1, %c0_2] : memref<13x1xf32, #tpu.memory_space<vmem>>, vector<8x1xf32>
    %c8 = arith.constant 8 : index
    %c0_3 = arith.constant 0 : index
    %2 = vector.load %arg5[%c8, %c0_3] : memref<13x1xf32, #tpu.memory_space<vmem>>, vector<4x1xf32>
    %c12 = arith.constant 12 : index
    %c0_4 = arith.constant 0 : index
    %3 = vector.load %arg5[%c12, %c0_4] : memref<13x1xf32, #tpu.memory_space<vmem>>, vector<1x1xf32>
    %c0_5 = arith.constant 0 : index
    %c0_6 = arith.constant 0 : index
    %4 = vector.load %arg2[%c0_5, %c0_6] : memref<8x13xf32, #tpu.memory_space<vmem>>, vector<8x13xf32>
    %cst = arith.constant dense<0.000000e+00> : vector<8x128xf32>
    %5 = tpu.matmul %4, %0, %cst {dimension_numbers = #tpu.dot_dimension_numbers<[1], [0], [0], [1], [0, 0, 1, 1], [], []>} : vector<8x13xf32>, vector<13x128xf32>, vector<8x128xf32> -> vector<8x128xf32>
    %6 = vector.broadcast %1 : vector<8x1xf32> to vector<8x128xf32>
    %7 = arith.addf %5, %6 : vector<8x128xf32>
    %cst_7 = arith.constant 0.000000e+00 : f32
    %8 = vector.broadcast %cst_7 : f32 to vector<8x128xf32>
    %9 = arith.maximumf %7, %8 : vector<8x128xf32>
    %c0_8 = arith.constant 0 : index
    %c0_9 = arith.constant 0 : index
    %10 = vector.load %arg3[%c0_8, %c0_9] : memref<4x8xf32, #tpu.memory_space<vmem>>, vector<4x8xf32>
    %cst_10 = arith.constant dense<0.000000e+00> : vector<4x128xf32>
    %11 = tpu.matmul %10, %9, %cst_10 {dimension_numbers = #tpu.dot_dimension_numbers<[1], [0], [0], [1], [0, 0, 1, 1], [], []>} : vector<4x8xf32>, vector<8x128xf32>, vector<4x128xf32> -> vector<4x128xf32>
    %12 = vector.broadcast %2 : vector<4x1xf32> to vector<4x128xf32>
    %13 = arith.addf %11, %12 : vector<4x128xf32>
    %cst_11 = arith.constant 0.000000e+00 : f32
    %14 = vector.broadcast %cst_11 : f32 to vector<4x128xf32>
    %15 = arith.maximumf %13, %14 : vector<4x128xf32>
    %c0_12 = arith.constant 0 : index
    %c0_13 = arith.constant 0 : index
    %16 = vector.load %arg4[%c0_12, %c0_13] : memref<1x4xf32, #tpu.memory_space<vmem>>, vector<1x4xf32>
    %cst_14 = arith.constant dense<0.000000e+00> : vector<1x128xf32>
    %17 = tpu.matmul %16, %15, %cst_14 {dimension_numbers = #tpu.dot_dimension_numbers<[1], [0], [0], [1], [0, 0, 1, 1], [], []>} : vector<1x4xf32>, vector<4x128xf32>, vector<1x128xf32> -> vector<1x128xf32>
    %18 = vector.broadcast %3 : vector<1x1xf32> to vector<1x128xf32>
    %19 = arith.addf %17, %18 : vector<1x128xf32>
    %c0_15 = arith.constant 0 : index
    %c0_16 = arith.constant 0 : index
    %20 = vector.load %arg6[%c0_15, %c0_16] : memref<1x128xf32, #tpu.memory_space<vmem>>, vector<1x128xf32>
    tpu.vector_store %arg6[%c0_15, %c0_16], %19 {strides = array<i32>} : memref<1x128xf32, #tpu.memory_space<vmem>>, vector<1x128xf32>,
    return
  }
  func.func @transform_0(%arg0: i32) -> (i32, i32) {
    %c0_i32 = arith.constant 0 : i32
    %c0_i32_0 = arith.constant 0 : i32
    return %c0_i32, %arg0 : i32, i32
  }
  func.func @transform_1(%arg0: i32) -> (i32, i32) {
    %c0_i32 = arith.constant 0 : i32
    %c0_i32_0 = arith.constant 0 : i32
    %c0_i32_1 = arith.constant 0 : i32
    return %c0_i32, %c0_i32_0 : i32, i32
  }
  func.func @transform_2(%arg0: i32) -> (i32, i32) {
    %c0_i32 = arith.constant 0 : i32
    %c0_i32_0 = arith.constant 0 : i32
    %c0_i32_1 = arith.constant 0 : i32
    return %c0_i32, %c0_i32_0 : i32, i32
  }
  func.func @transform_3(%arg0: i32) -> (i32, i32) {
    %c0_i32 = arith.constant 0 : i32
    %c0_i32_0 = arith.constant 0 : i32
    %c0_i32_1 = arith.constant 0 : i32
    return %c0_i32, %c0_i32_0 : i32, i32
  }
  func.func @transform_4(%arg0: i32) -> (i32, i32) {
    %c0_i32 = arith.constant 0 : i32
    %c0_i32_0 = arith.constant 0 : i32
    %c0_i32_1 = arith.constant 0 : i32
    return %c0_i32, %c0_i32_0 : i32, i32
  }
  func.func @transform_5(%arg0: i32) -> (i32, i32) {
    %c0_i32 = arith.constant 0 : i32
    %c0_i32_0 = arith.constant 0 : i32
    return %c0_i32, %arg0 : i32, i32
  }
}

</mosaic_0001>

<llo_original>
// kernel: tpu_custom_call.1
$region0: #{tpu_custom_call.1}
  #allocation0 [shape = 'u32[]', space=smem, size = 0x4, offset = 0x4, fixed_abs, tag = 'smem constant byte address 0x4 - core index']
  #allocation1 [shape = 'u32[144,128]{1,0:T(1,128)}', space=vmem, size = 0x12000, scoped, tag = 'internal scratch']
  %s0 = inlined_call_operand.vmem [shape: f32[13,128], index: 0, kind: input, shape index: {}]
  %s1 = inlined_call_operand.hbm [shape: f32[8,13], index: 1, kind: input, shape index: {}]
  %s2 = inlined_call_operand.vmem [shape: f32[4,8], index: 2, kind: input, shape index: {}]
  %s3 = inlined_call_operand.vmem [shape: f32[1,4], index: 3, kind: input, shape index: {}]
  %s4 = inlined_call_operand.vmem [shape: f32[13,1], index: 4, kind: input, shape index: {}]
  %s5 = inlined_call_operand.hbm [shape: f32[1,128], index: 5, kind: output, shape index: {}]
  %s6 = sld [smem:[#allocation0]]
  $region34: #{tpu_custom_call.1} parent=0
    _
  %s8 = ssub.s32 1, %s6
  %s9 = scalar_select 0, %s8, %s6
  $region1: #{tpu_custom_call.1} parent=0
    #allocation2 [shape = 'u8[4096]{0}', space=vmem, size = 0x1000, scoped, tag = 'input window, operand 1, single buffered']
    #allocation3 [shape = 's32[1]{0}', space=sflag, size = 0x4, scoped, tag = 'scoped memory for tpu_custom_call.1']
    #allocation4 [shape = 's32[1]{0}', space=sflag, size = 0x4, scoped, tag = 'scoped memory for tpu_custom_call.1']
    #allocation5 [shape = 'u8[512]{0}', space=vmem, size = 0x400, scoped, tag = 'output window, operand 0, single buffered']
    %10 = vsyncpa [#allocation3], 0
    %11 = vsyncpa [#allocation4], 0
    // Predicated region
    $region2: #{tpu_custom_call.1} parent=1 // pred_check
      _
    $region3: #{tpu_custom_call.1} parent=1 // pred_check_branch
      %13 = sbr.rel (0) target = $region5
    $region4: #{tpu_custom_call.1} parent=1 // pred_region
      _
    $region5: #{tpu_custom_call.1} parent=1 // pred_fallthru
      _
    // Predicated region
    $region6: #{tpu_custom_call.1} parent=1 // pred_check
      _
    $region7: #{tpu_custom_call.1} parent=1 // pred_check_branch
      %15 = sbr.rel (0) target = $region9
    $region8: #{tpu_custom_call.1} parent=1 // pred_region
      %s17 = ssub.s32 128, 128
      %18 = vsyncadd [#allocation3], %s17
      %s20 = sshll.u32 [#allocation2], 4
      %s21 = int_to_ptr.vmem [resolvable:$true] %s20
      %23 = dma.hbm_to_vmem [thread:$0]  %s1, 128, %s21, [#allocation3]
    $region9: #{tpu_custom_call.1} parent=1 // pred_fallthru
      _
    // Predicated region
    $region10: #{tpu_custom_call.1} parent=1 // pred_check
      _
    $region11: #{tpu_custom_call.1} parent=1 // pred_check_branch
      %25 = sbr.rel (0) target = $region13
    $region12: #{tpu_custom_call.1} parent=1 // pred_region
      _
    $region13: #{tpu_custom_call.1} parent=1 // pred_fallthru
      _
    // Predicated region
    $region14: #{tpu_custom_call.1} parent=1 // pred_check
      _
    $region15: #{tpu_custom_call.1} parent=1 // pred_check_branch
      %27 = sbr.rel (0) target = $region17
    $region16: #{tpu_custom_call.1} parent=1 // pred_region
      _
    $region17: #{tpu_custom_call.1} parent=1 // pred_fallthru
      _
    // Predicated region
    $region18: #{tpu_custom_call.1} parent=1 // pred_check
      _
    $region19: #{tpu_custom_call.1} parent=1 // pred_check_branch
      %29 = sbr.rel (0) target = $region21
    $region20: #{tpu_custom_call.1} parent=1 // pred_region
      _
    $region21: #{tpu_custom_call.1} parent=1 // pred_fallthru
      _
    // Predicated region
    $region22: #{tpu_custom_call.1} parent=1 // pred_check
      _
    $region23: #{tpu_custom_call.1} parent=1 // pred_check_branch
      %31 = sbr.rel (0) target = $region25
    $region24: #{tpu_custom_call.1} parent=1 // pred_region
      %32 = dma.done [#allocation3], 128
    $region25: #{tpu_custom_call.1} parent=1 // pred_fallthru
      _
    %v33 = vld [vmem:[%s0] sm:$0xff]
    %v34 = vld [vmem:[%s0 + $0x8] sm:$0x1f]
    %v35 = vld [vmem:[%s4] sm:$0xff]
    %v36 = vld [vmem:[%s4 + $0x8] sm:$0xf]
    %v37 = vld [vmem:[%s4 + $0xc] sm:$0x1]
    %v38 = vld [vmem:[#allocation2] sm:$0xff]
    %40 = vset.pattern.permute.xlu0 0
    %41 = vperm.xlu0 %40, %v35
    %v42 = vpop.permute.xlu0 %41
    %vm44 = vcmask 105472
    %v46 = vsel %vm44, %v38, 0
    %vm48 = vcmask 1044480
    %v50 = vsel %vm48, %v34, 0
    %52 = vmatprep.subr.mxu0 0.0
    %53 = vmatpush1.msra.mxu0 %v33
    %54 = vmatprep.subr.mxu0 0.0
    %55 = vmatpush1.msra.mxu0 %v50
    %56 = vmatprep.subr.mxu0 0.0
    %57 = vmatpush1.msra.mxu0 0.0
    %58 = vmatprep.subr.mxu0 0.0
    %59 = vmatpush1.msra.mxu0 0.0
    %60 = vmatprep.subr.mxu0 0.0
    %61 = vmatpush1.msra.mxu0 0.0
    %62 = vmatprep.subr.mxu0 0.0
    %63 = vmatpush1.msra.mxu0 0.0
    %64 = vmatprep.subr.mxu0 0.0
    %65 = vmatpush1.msra.mxu0 0.0
    %66 = vmatprep.subr.mxu0 0.0
    %67 = vmatpush1.msra.mxu0 0.0
    %68 = vmatprep.subr.mxu0 0.0
    %69 = vmatpush1.msra.mxu0 0.0
    %70 = vmatprep.subr.mxu0 0.0
    %71 = vmatpush1.msra.mxu0 0.0
    %72 = vmatprep.subr.mxu0 0.0
    %73 = vmatpush1.msra.mxu0 0.0
    %74 = vmatprep.subr.mxu0 0.0
    %75 = vmatpush1.msra.mxu0 0.0
    %76 = vmatprep.subr.mxu0 0.0
    %77 = vmatpush1.msra.mxu0 0.0
    %78 = vmatprep.subr.mxu0 0.0
    %79 = vmatpush1.msra.mxu0 0.0
    %80 = vmatprep.subr.mxu0 0.0
    %81 = vmatpush1.msra.mxu0 0.0
    %82 = vmatprep.subr.mxu0 0.0
    %83 = vmatpush1.msra.mxu0 0.0
    %84 = vmatprep.subr.mxu0 0.0
    %85 = vmatpush1.msra.mxu0 0.0
    %86 = vmatprep.subr.mxu0 0.0
    %87 = vmatpush1.msra.mxu0 0.0
    %88 = vmatprep.subr.mxu0 0.0
    %89 = vmatpush1.msra.mxu0 0.0
    %90 = vmatprep.subr.mxu0 0.0
    %91 = vmatpush1.msra.mxu0 0.0
    %92 = vmatprep.subr.mxu0 0.0
    %93 = vmatpush1.msra.mxu0 0.0
    %94 = vmatprep.subr.mxu0 0.0
    %95 = vmatpush1.msra.mxu0 0.0
    %96 = vmatprep.subr.mxu0 0.0
    %97 = vmatpush1.msra.mxu0 0.0
    %98 = vmatprep.subr.mxu0 0.0
    %99 = vmatpush1.msra.mxu0 0.0
    %100 = vmatprep.subr.mxu0 0.0
    %101 = vmatpush1.msra.mxu0 0.0
    %102 = vmatprep.subr.mxu0 0.0
    %103 = vmatpush1.msra.mxu0 0.0
    %104 = vmatprep.subr.mxu0 0.0
    %105 = vmatpush1.msra.mxu0 0.0
    %106 = vmatprep.subr.mxu0 0.0
    %107 = vmatpush1.msra.mxu0 0.0
    %108 = vmatprep.subr.mxu0 0.0
    %109 = vmatpush1.msra.mxu0 0.0
    %110 = vmatprep.subr.mxu0 0.0
    %111 = vmatpush1.msra.mxu0 0.0
    %112 = vmatprep.subr.mxu0 0.0
    %113 = vmatpush1.msra.mxu0 0.0
    %114 = vmatprep.subr.mxu0 0.0
    %115 = vmatpush1.msra.mxu0 0.0
    %116 = vmatprep.mubr.f32.mxu0 0.0
    %117 = vmatmul.mubr.f32.gmra.mrb[0].mxu0 %v46
    %v118 = vpop.f32.mrb[0].mxu0
    %v119 = vadd.f32 %v42, %v118
    %v120 = vpop.f32.mrb[0].mxu0
    %121 = vdwg.mxu0
    %v122 = vmax.f32 %v119, 0.0
    %v123 = vld [vmem:[%s2] sm:$0xf]
    %125 = vset.pattern.permute.xlu0 0
    %126 = vperm.xlu0 %125, %v36
    %v127 = vpop.permute.xlu0 %126
    %vm129 = vcmask 64512
    %v131 = vsel %vm129, %v123, 0
    %133 = vmatprep.subr.mxu0 0.0
    %134 = vmatpush1.msra.mxu0 %v122
    %135 = vmatprep.subr.mxu0 0.0
    %136 = vmatpush1.msra.mxu0 0.0
    %137 = vmatprep.subr.mxu0 0.0
    %138 = vmatpush1.msra.mxu0 0.0
    %139 = vmatprep.subr.mxu0 0.0
    %140 = vmatpush1.msra.mxu0 0.0
    %141 = vmatprep.subr.mxu0 0.0
    %142 = vmatpush1.msra.mxu0 0.0
    %143 = vmatprep.subr.mxu0 0.0
    %144 = vmatpush1.msra.mxu0 0.0
    %145 = vmatprep.subr.mxu0 0.0
    %146 = vmatpush1.msra.mxu0 0.0
    %147 = vmatprep.subr.mxu0 0.0
    %148 = vmatpush1.msra.mxu0 0.0
    %149 = vmatprep.subr.mxu0 0.0
    %150 = vmatpush1.msra.mxu0 0.0
    %151 = vmatprep.subr.mxu0 0.0
    %152 = vmatpush1.msra.mxu0 0.0
    %153 = vmatprep.subr.mxu0 0.0
    %154 = vmatpush1.msra.mxu0 0.0
    %155 = vmatprep.subr.mxu0 0.0
    %156 = vmatpush1.msra.mxu0 0.0
    %157 = vmatprep.subr.mxu0 0.0
    %158 = vmatpush1.msra.mxu0 0.0
    %159 = vmatprep.subr.mxu0 0.0
    %160 = vmatpush1.msra.mxu0 0.0
    %161 = vmatprep.subr.mxu0 0.0
    %162 = vmatpush1.msra.mxu0 0.0
    %163 = vmatprep.subr.mxu0 0.0
    %164 = vmatpush1.msra.mxu0 0.0
    %165 = vmatprep.subr.mxu0 0.0
    %166 = vmatpush1.msra.mxu0 0.0
    %167 = vmatprep.subr.mxu0 0.0
    %168 = vmatpush1.msra.mxu0 0.0
    %169 = vmatprep.subr.mxu0 0.0
    %170 = vmatpush1.msra.mxu0 0.0
    %171 = vmatprep.subr.mxu0 0.0
    %172 = vmatpush1.msra.mxu0 0.0
    %173 = vmatprep.subr.mxu0 0.0
    %174 = vmatpush1.msra.mxu0 0.0
    %175 = vmatprep.subr.mxu0 0.0
    %176 = vmatpush1.msra.mxu0 0.0
    %177 = vmatprep.subr.mxu0 0.0
    %178 = vmatpush1.msra.mxu0 0.0
    %179 = vmatprep.subr.mxu0 0.0
    %180 = vmatpush1.msra.mxu0 0.0
    %181 = vmatprep.subr.mxu0 0.0
    %182 = vmatpush1.msra.mxu0 0.0
    %183 = vmatprep.subr.mxu0 0.0
    %184 = vmatpush1.msra.mxu0 0.0
    %185 = vmatprep.subr.mxu0 0.0
    %186 = vmatpush1.msra.mxu0 0.0
    %187 = vmatprep.subr.mxu0 0.0
    %188 = vmatpush1.msra.mxu0 0.0
    %189 = vmatprep.subr.mxu0 0.0
    %190 = vmatpush1.msra.mxu0 0.0
    %191 = vmatprep.subr.mxu0 0.0
    %192 = vmatpush1.msra.mxu0 0.0
    %193 = vmatprep.subr.mxu0 0.0
    %194 = vmatpush1.msra.mxu0 0.0
    %195 = vmatprep.subr.mxu0 0.0
    %196 = vmatpush1.msra.mxu0 0.0
    %197 = vmatprep.mubr.f32.mxu0 0.0
    %198 = vmatmul.mubr.f32.gmra.mrb[0].mxu0 %v131
    %v199 = vpop.f32.mrb[0].mxu0
    %v200 = vadd.f32 %v127, %v199
    %v201 = vpop.f32.mrb[0].mxu0
    %202 = vdwg.mxu0
    %v203 = vmax.f32 %v200, 0.0
    %v204 = vld [vmem:[%s3] sm:$0x1]
    %206 = vset.pattern.permute.xlu0 0
    %207 = vperm.xlu0 %206, %v37
    %v208 = vpop.permute.xlu0 %207
    %vm210 = vcmask 31744
    %v212 = vsel %vm210, %v204, 0
    %vm214 = vcmask 1043456
    %v216 = vsel %vm214, %v203, 0
    %218 = vmatprep.subr.mxu0 0.0
    %219 = vmatpush1.msra.mxu0 %v216
    %220 = vmatprep.subr.mxu0 0.0
    %221 = vmatpush1.msra.mxu0 0.0
    %222 = vmatprep.subr.mxu0 0.0
    %223 = vmatpush1.msra.mxu0 0.0
    %224 = vmatprep.subr.mxu0 0.0
    %225 = vmatpush1.msra.mxu0 0.0
    %226 = vmatprep.subr.mxu0 0.0
    %227 = vmatpush1.msra.mxu0 0.0
    %228 = vmatprep.subr.mxu0 0.0
    %229 = vmatpush1.msra.mxu0 0.0
    %230 = vmatprep.subr.mxu0 0.0
    %231 = vmatpush1.msra.mxu0 0.0
    %232 = vmatprep.subr.mxu0 0.0
    %233 = vmatpush1.msra.mxu0 0.0
    %234 = vmatprep.subr.mxu0 0.0
    %235 = vmatpush1.msra.mxu0 0.0
    %236 = vmatprep.subr.mxu0 0.0
    %237 = vmatpush1.msra.mxu0 0.0
    %238 = vmatprep.subr.mxu0 0.0
    %239 = vmatpush1.msra.mxu0 0.0
    %240 = vmatprep.subr.mxu0 0.0
    %241 = vmatpush1.msra.mxu0 0.0
    %242 = vmatprep.subr.mxu0 0.0
    %243 = vmatpush1.msra.mxu0 0.0
    %244 = vmatprep.subr.mxu0 0.0
    %245 = vmatpush1.msra.mxu0 0.0
    %246 = vmatprep.subr.mxu0 0.0
    %247 = vmatpush1.msra.mxu0 0.0
    %248 = vmatprep.subr.mxu0 0.0
    %249 = vmatpush1.msra.mxu0 0.0
    %250 = vmatprep.subr.mxu0 0.0
    %251 = vmatpush1.msra.mxu0 0.0
    %252 = vmatprep.subr.mxu0 0.0
    %253 = vmatpush1.msra.mxu0 0.0
    %254 = vmatprep.subr.mxu0 0.0
    %255 = vmatpush1.msra.mxu0 0.0
    %256 = vmatprep.subr.mxu0 0.0
    %257 = vmatpush1.msra.mxu0 0.0
    %258 = vmatprep.subr.mxu0 0.0
    %259 = vmatpush1.msra.mxu0 0.0
    %260 = vmatprep.subr.mxu0 0.0
    %261 = vmatpush1.msra.mxu0 0.0
    %262 = vmatprep.subr.mxu0 0.0
    %263 = vmatpush1.msra.mxu0 0.0
    %264 = vmatprep.subr.mxu0 0.0
    %265 = vmatpush1.msra.mxu0 0.0
    %266 = vmatprep.subr.mxu0 0.0
    %267 = vmatpush1.msra.mxu0 0.0
    %268 = vmatprep.subr.mxu0 0.0
    %269 = vmatpush1.msra.mxu0 0.0
    %270 = vmatprep.subr.mxu0 0.0
    %271 = vmatpush1.msra.mxu0 0.0
    %272 = vmatprep.subr.mxu0 0.0
    %273 = vmatpush1.msra.mxu0 0.0
    %274 = vmatprep.subr.mxu0 0.0
    %275 = vmatpush1.msra.mxu0 0.0
    %276 = vmatprep.subr.mxu0 0.0
    %277 = vmatpush1.msra.mxu0 0.0
    %278 = vmatprep.subr.mxu0 0.0
    %279 = vmatpush1.msra.mxu0 0.0
    %280 = vmatprep.subr.mxu0 0.0
    %281 = vmatpush1.msra.mxu0 0.0
    %282 = vmatprep.mubr.f32.mxu0 0.0
    %283 = vmatmul.mubr.f32.gmra.mrb[0].mxu0 %v212
    %v284 = vpop.f32.mrb[0].mxu0
    %v285 = vadd.f32 %v208, %v284
    %v286 = vpop.f32.mrb[0].mxu0
    %287 = vdwg.mxu0
    %288 = vst [vmem:[#allocation5] sm:$0x1] %v285
    // Predicated region
    $region26: #{tpu_custom_call.1} parent=1 // pred_check
      _
    $region27: #{tpu_custom_call.1} parent=1 // pred_check_branch
      %290 = sbr.rel (0) target = $region29
    $region28: #{tpu_custom_call.1} parent=1 // pred_region
      %s292 = ssub.s32 16, 16
      %293 = vsyncadd [#allocation4], %s292
      %s295 = sshll.u32 [#allocation5], 4
      %s296 = int_to_ptr.vmem [resolvable:$true] %s295
      %298 = dma.vmem_to_hbm [thread:$0]  %s296, 16, %s5, [#allocation4]
    $region29: #{tpu_custom_call.1} parent=1 // pred_fallthru
      _
    // Predicated region
    $region30: #{tpu_custom_call.1} parent=1 // pred_check
      _
    $region31: #{tpu_custom_call.1} parent=1 // pred_check_branch
      %300 = sbr.rel (0) target = $region33
    $region32: #{tpu_custom_call.1} parent=1 // pred_region
      %301 = dma.done [#allocation4], 16
    $region33: #{tpu_custom_call.1} parent=1 // pred_fallthru
      _
    %302 = vsyncpa [#allocation3], 1
    %303 = vsyncpa [#allocation4], 1

</llo_original>
